<compile_context>
chip_gen: v6e
topology: v6e:2x2x1
jax: 0.10.0
libtpu: 0.0.40
codegen_flags: <defaults>
</compile_context>

<pallas_src>
import jax
import jax.numpy as jnp
from jax import lax
from jax.experimental import pallas as pl
from jax.experimental.pallas import tpu as pltpu

N = 16      # number of nodes (homogeneous graph: src == dst)
DIN = 16    # in_feats
F = 16      # out_feats (per head)
H = 4       # num_heads
NEG_SLOPE = 0.2


def gat_kernel(x_ref, w_ref, vl_ref, adj_ref, bias_ref, out_ref):
    """Fused GAT forward: wide projection matmul, per-head masked edge-softmax,
    weighted aggregation, single lane-dense output store."""
    x = x_ref[...]                      # (N, DIN)  bf16
    adj = adj_ref[...]                  # (N_dst, N_src) f32, entries in {0,1}

    # One MXU matmul produces projected features for ALL heads plus the folded
    # attn_r logits:  fe = x @ [W_all | (W_h @ attn_r_h)_h]  -> (N, H*F + H).
    fe = jnp.dot(x, w_ref[...], preferred_element_type=jnp.float32)
    feat_all = fe[:, : H * F]           # (N, H*F) f32
    er_all = fe[:, H * F:]              # (N, H)   f32   er[d,h] = <feat_h[d], attn_r[h]>

    # attn_l logits for all heads in one MXU op, transposed layout (H, N):
    # el_t[h, s] = sum_d vl[h, d] * x[s, d]   (contract both on feature dim,
    # so no x^T input and no in-kernel transpose is needed).
    el_t = lax.dot_general(vl_ref[...], x, (((1,), (1,)), ((), ())),
                           preferred_element_type=jnp.float32)        # (H, N)

    # Head-independent additive mask: one VPU select shared by every head.
    mask_bias = jnp.where(adj > 0, 0.0, -1e30)                        # (N, N) f32

    outs = []
    for h in range(H):                  # static unroll over heads
        # e[d, s] = leaky_relu(el[s] + er[d])
        scores = er_all[:, h:h + 1] + el_t[h:h + 1, :]                # (dst, src)
        scores = jnp.maximum(scores, NEG_SLOPE * scores)              # leaky relu

        # masked edge-softmax over incoming edges of each dst node
        masked = scores + mask_bias
        m = jnp.max(masked, axis=1, keepdims=True)                    # (N, 1)
        # multiply by adj -> exact zeros on non-edges AND on 0-in-degree rows
        p = jnp.exp(masked - m) * adj                                 # (N, N)
        denom = jnp.sum(p, axis=1, keepdims=True)                     # (N, 1)
        inv = pl.reciprocal(jnp.maximum(denom, 1e-30), approx=True)   # EUP, not VPU div
        a = p * inv                                                   # rows of 0 for 0-in-degree
        # TODO(synk): attn_drop / feat_drop are identity at p=0.0 (module default).

        # aggregation: rst[d] = sum_s a[d, s] * feat_h[s]   (bf16 MXU, f32 acc)
        feat_h = feat_all[:, h * F:(h + 1) * F]
        outs.append(jnp.dot(a.astype(jnp.bfloat16), feat_h.astype(jnp.bfloat16),
                            preferred_element_type=jnp.float32))

    # Single lane-dense store of all heads + one bias add.
    out_ref[...] = jnp.concatenate(outs, axis=1) + bias_ref[...]


def _full_spec(shape):
    return pl.BlockSpec(shape, lambda i, _n=len(shape): (0,) * _n)


def gat_forward(x, adj, w_heads, attn_l, attn_r, bias):
    """x: (N, DIN), adj: (N_dst, N_src), w_heads: (H, DIN, F),
    attn_l/attn_r: (H, F), bias: (H*F,)  ->  (N, H*F)."""
    # Fold attn vectors into the projection (same contraction, reordered):
    #   el[s,h] = x[s] @ (W_h @ attn_l[h]),  er[d,h] = x[d] @ (W_h @ attn_r[h])
    vl_all = jnp.einsum("hdf,hf->hd", w_heads, attn_l)                 # (H, DIN)
    vr_all = jnp.einsum("hdf,hf->hd", w_heads, attn_r)                 # (H, DIN)
    w_all = jnp.transpose(w_heads, (1, 0, 2)).reshape(DIN, H * F)      # (DIN, H*F)
    w_big = jnp.concatenate([w_all, vr_all.T], axis=1)                 # (DIN, H*F + H)

    x_bf = x.astype(jnp.bfloat16)                                      # bf16 MXU operands
    w_bf = w_big.astype(jnp.bfloat16)
    vl_bf = vl_all.astype(jnp.bfloat16)
    bias2 = bias.reshape(1, H * F)

    # TODO(synk): at realistic N, tile dst nodes on this ("parallel") grid axis
    # (256-wide tiles on v6e/v7x, 128 on v5e), keep the src reduction last with a
    # VMEM accumulator, and store adj as int8; also batch many small graphs into
    # one pallas_call — at N=16 a single grid step is optimal.
    return pl.pallas_call(
        gat_kernel,
        out_shape=jax.ShapeDtypeStruct((N, H * F), jnp.float32),
        grid=(1,),
        in_specs=[
            _full_spec((N, DIN)),            # x (bf16)
            _full_spec((DIN, H * F + H)),    # [W_all | folded attn_r] (bf16)
            _full_spec((H, DIN)),            # folded attn_l vectors (bf16)
            _full_spec((N, N)),              # dense adjacency (dst, src), f32
            _full_spec((1, H * F)),          # bias
        ],
        out_specs=_full_spec((N, H * F)),
        compiler_params=pltpu.CompilerParams(dimension_semantics=("parallel",)),
    )(x_bf, w_bf, vl_bf, adj, bias2)


def gat_reference(x, adj, w_heads, attn_l, attn_r, bias):
    """Pure-JAX f32 reference matching DGL GATConv forward semantics."""
    feat = jnp.einsum("nd,hdf->nhf", x, w_heads)               # (N, H, F)
    el = jnp.sum(feat * attn_l[None], axis=-1)                 # (N, H)
    er = jnp.sum(feat * attn_r[None], axis=-1)                 # (N, H)
    e = el[None, :, :] + er[:, None, :]                        # (dst, src, H)
    e = jnp.where(e > 0, e, NEG_SLOPE * e)
    mask = adj[:, :, None] > 0
    masked = jnp.where(mask, e, -1e30)
    m = jnp.max(masked, axis=1, keepdims=True)
    p = jnp.where(mask, jnp.exp(e - m), 0.0)
    denom = jnp.sum(p, axis=1, keepdims=True)
    a = jnp.where(denom > 0, p / jnp.maximum(denom, 1e-30), 0.0)
    rst = jnp.einsum("dsh,shf->dhf", a, feat)                  # (N, H, F)
    rst = rst + bias.reshape(1, H, F)
    return rst.reshape(N, H * F)                               # concat_out=True


if __name__ == "__main__":
    key = jax.random.PRNGKey(0)
    kx, kw, kal, kar, kb, kadj = jax.random.split(key, 6)

    # deterministic parameter init (xavier-normal-like, gain = sqrt(2))
    gain = jnp.sqrt(2.0)
    w_std = gain * jnp.sqrt(2.0 / (DIN + H * F))
    fc_w = w_std * jax.random.normal(kw, (H * F, DIN), jnp.float32)  # torch Linear weight
    # y = x @ W.T ; split heads:  w_heads[h] = W.T[:, h*F:(h+1)*F]
    w_heads = jnp.transpose(fc_w).reshape(DIN, H, F).transpose(1, 0, 2)  # (H, DIN, F)
    a_std = gain * jnp.sqrt(2.0 / (H * F + F))
    attn_l = a_std * jax.random.normal(kal, (H, F), jnp.float32)
    attn_r = a_std * jax.random.normal(kar, (H, F), jnp.float32)
    bias = 0.1 * jax.random.normal(kb, (H * F,), jnp.float32)

    # deterministic inputs: node features + random directed graph
    x = jax.random.normal(kx, (N, DIN), jnp.float32)
    adj = jax.random.bernoulli(kadj, 0.35, (N, N)).astype(jnp.float32)

    out = jax.block_until_ready(gat_forward(x, adj, w_heads, attn_l, attn_r, bias))
    ref = gat_reference(x, adj, w_heads, attn_l, attn_r, bias)

    assert out.shape == (N, H * F), out.shape
    max_err = float(jnp.max(jnp.abs(out - ref)))
    # tolerance relaxed slightly vs f32-only version: MXU operands are bf16 now
    assert jnp.allclose(out, ref, rtol=3e-2, atol=3e-2), max_err
    print("KERNEL_OK")
</pallas_src>

<mosaic_0001>
module attributes {stable_mosaic.version = 11 : i64} {
  func.func @gat_kernel(%arg0: i32, %arg1: memref<16x16xbf16, #tpu.memory_space<vmem>>, %arg2: memref<16x68xbf16, #tpu.memory_space<vmem>>, %arg3: memref<4x16xbf16, #tpu.memory_space<vmem>>, %arg4: memref<16x16xf32, #tpu.memory_space<vmem>>, %arg5: memref<1x64xf32, #tpu.memory_space<vmem>>, %arg6: memref<16x64xf32, #tpu.memory_space<vmem>>) attributes {dimension_semantics = [#tpu.dimension_semantics<parallel>], iteration_bounds = array<i64: 1>, scalar_prefetch = 0 : i64, scratch_operands = 0 : i64, tpu.core_type = #tpu.core_type<tc>, window_params = [{pipeline_mode = #tpu.pipeline_mode<synchronous>, transform_indices = @transform_0, window_bounds = array<i64: 16, 16>}, {pipeline_mode = #tpu.pipeline_mode<synchronous>, transform_indices = @transform_1, window_bounds = array<i64: 16, 68>}, {pipeline_mode = #tpu.pipeline_mode<synchronous>, transform_indices = @transform_2, window_bounds = array<i64: 4, 16>}, {pipeline_mode = #tpu.pipeline_mode<synchronous>, transform_indices = @transform_3, window_bounds = array<i64: 16, 16>}, {pipeline_mode = #tpu.pipeline_mode<synchronous>, transform_indices = @transform_4, window_bounds = array<i64: 1, 64>}, {pipeline_mode = #tpu.pipeline_mode<synchronous>, transform_indices = @transform_5, window_bounds = array<i64: 16, 64>}]} {
    %c0 = arith.constant 0 : index
    %c0_0 = arith.constant 0 : index
    %0 = vector.load %arg1[%c0, %c0_0] : memref<16x16xbf16, #tpu.memory_space<vmem>>, vector<16x16xbf16>
    %c0_1 = arith.constant 0 : index
    %c0_2 = arith.constant 0 : index
    %1 = vector.load %arg4[%c0_1, %c0_2] : memref<16x16xf32, #tpu.memory_space<vmem>>, vector<16x16xf32>
    %c0_3 = arith.constant 0 : index
    %c0_4 = arith.constant 0 : index
    %2 = vector.load %arg2[%c0_3, %c0_4] : memref<16x68xbf16, #tpu.memory_space<vmem>>, vector<16x68xbf16>
    %cst = arith.constant dense<0.000000e+00> : vector<16x68xf32>
    %3 = tpu.matmul %0, %2, %cst {dimension_numbers = #tpu.dot_dimension_numbers<[1], [0], [0], [1], [0, 0, 1, 1], [], []>} : vector<16x16xbf16>, vector<16x68xbf16>, vector<16x68xf32> -> vector<16x68xf32>
    %4 = vector.extract_strided_slice %3 {offsets = [0, 0], sizes = [16, 64], strides = [1, 1]} : vector<16x68xf32> to vector<16x64xf32>
    %5 = vector.extract_strided_slice %3 {offsets = [0, 64], sizes = [16, 4], strides = [1, 1]} : vector<16x68xf32> to vector<16x4xf32>
    %c0_5 = arith.constant 0 : index
    %c0_6 = arith.constant 0 : index
    %6 = vector.load %arg3[%c0_5, %c0_6] : memref<4x16xbf16, #tpu.memory_space<vmem>>, vector<4x16xbf16>
    %cst_7 = arith.constant dense<0.000000e+00> : vector<4x16xf32>
    %7 = tpu.matmul %6, %0, %cst_7 {dimension_numbers = #tpu.dot_dimension_numbers<[1], [1], [0], [0], [0, 0, 1, 0], [], []>} : vector<4x16xbf16>, vector<16x16xbf16>, vector<4x16xf32> -> vector<4x16xf32>
    %cst_8 = arith.constant 0.000000e+00 : f32
    %8 = vector.broadcast %cst_8 : f32 to vector<16x16xf32>
    %9 = arith.cmpf ogt, %1, %8 : vector<16x16xf32>
    %cst_9 = arith.constant 0.000000e+00 : f32
    %cst_10 = arith.constant -1.000000e+30 : f32
    %10 = vector.broadcast %cst_9 : f32 to vector<16x16xf32>
    %11 = vector.broadcast %cst_10 : f32 to vector<16x16xf32>
    %12 = arith.select %9, %10, %11 : vector<16x16xi1>, vector<16x16xf32>
    %13 = vector.extract_strided_slice %5 {offsets = [0, 0], sizes = [16, 1], strides = [1, 1]} : vector<16x4xf32> to vector<16x1xf32>
    %14 = vector.extract_strided_slice %7 {offsets = [0, 0], sizes = [1, 16], strides = [1, 1]} : vector<4x16xf32> to vector<1x16xf32>
    %15 = vector.broadcast %13 : vector<16x1xf32> to vector<16x16xf32>
    %16 = vector.broadcast %14 : vector<1x16xf32> to vector<16x16xf32>
    %17 = arith.addf %15, %16 : vector<16x16xf32>
    %cst_11 = arith.constant 2.000000e-01 : f32
    %18 = vector.broadcast %cst_11 : f32 to vector<16x16xf32>
    %19 = arith.mulf %18, %17 : vector<16x16xf32>
    %20 = arith.maximumf %17, %19 : vector<16x16xf32>
    %21 = arith.addf %20, %12 : vector<16x16xf32>
    %cst_12 = arith.constant dense<0xFF800000> : vector<16xf32>
    %22 = vector.multi_reduction <maximumf>, %21, %cst_12 [1] : vector<16x16xf32> to vector<16xf32>
    %23 = vector.shape_cast %22 : vector<16xf32> to vector<16x1xf32>
    %24 = vector.broadcast %23 : vector<16x1xf32> to vector<16x16xf32>
    %25 = arith.subf %21, %24 : vector<16x16xf32>
    %26 = math.exp %25 : vector<16x16xf32>
    %27 = arith.mulf %26, %1 : vector<16x16xf32>
    %cst_13 = arith.constant dense<0.000000e+00> : vector<16xf32>
    %28 = vector.multi_reduction <add>, %27, %cst_13 [1] : vector<16x16xf32> to vector<16xf32>
    %29 = vector.shape_cast %28 : vector<16xf32> to vector<16x1xf32>
    %cst_14 = arith.constant 1.000000e-30 : f32
    %30 = vector.broadcast %cst_14 : f32 to vector<16x1xf32>
    %31 = arith.maximumf %29, %30 : vector<16x1xf32>
    %32 = tpu.reciprocal %31 {approx = true} : vector<16x1xf32> -> vector<16x1xf32>
    %33 = vector.broadcast %32 : vector<16x1xf32> to vector<16x16xf32>
    %34 = arith.mulf %27, %33 : vector<16x16xf32>
    %35 = vector.extract_strided_slice %4 {offsets = [0, 0], sizes = [16, 16], strides = [1, 1]} : vector<16x64xf32> to vector<16x16xf32>
    %36 = arith.truncf %34 : vector<16x16xf32> to vector<16x16xbf16>
    %37 = arith.truncf %35 : vector<16x16xf32> to vector<16x16xbf16>
    %cst_15 = arith.constant dense<0.000000e+00> : vector<16x16xf32>
    %38 = tpu.matmul %36, %37, %cst_15 {dimension_numbers = #tpu.dot_dimension_numbers<[1], [0], [0], [1], [0, 0, 1, 1], [], []>} : vector<16x16xbf16>, vector<16x16xbf16>, vector<16x16xf32> -> vector<16x16xf32>
    %39 = vector.extract_strided_slice %5 {offsets = [0, 1], sizes = [16, 1], strides = [1, 1]} : vector<16x4xf32> to vector<16x1xf32>
    %40 = vector.extract_strided_slice %7 {offsets = [1, 0], sizes = [1, 16], strides = [1, 1]} : vector<4x16xf32> to vector<1x16xf32>
    %41 = vector.broadcast %39 : vector<16x1xf32> to vector<16x16xf32>
    %42 = vector.broadcast %40 : vector<1x16xf32> to vector<16x16xf32>
    %43 = arith.addf %41, %42 : vector<16x16xf32>
    %cst_16 = arith.constant 2.000000e-01 : f32
    %44 = vector.broadcast %cst_16 : f32 to vector<16x16xf32>
    %45 = arith.mulf %44, %43 : vector<16x16xf32>
    %46 = arith.maximumf %43, %45 : vector<16x16xf32>
    %47 = arith.addf %46, %12 : vector<16x16xf32>
    %cst_17 = arith.constant dense<0xFF800000> : vector<16xf32>
    %48 = vector.multi_reduction <maximumf>, %47, %cst_17 [1] : vector<16x16xf32> to vector<16xf32>
    %49 = vector.shape_cast %48 : vector<16xf32> to vector<16x1xf32>
    %50 = vector.broadcast %49 : vector<16x1xf32> to vector<16x16xf32>
    %51 = arith.subf %47, %50 : vector<16x16xf32>
    %52 = math.exp %51 : vector<16x16xf32>
    %53 = arith.mulf %52, %1 : vector<16x16xf32>
    %cst_18 = arith.constant dense<0.000000e+00> : vector<16xf32>
    %54 = vector.multi_reduction <add>, %53, %cst_18 [1] : vector<16x16xf32> to vector<16xf32>
    %55 = vector.shape_cast %54 : vector<16xf32> to vector<16x1xf32>
    %cst_19 = arith.constant 1.000000e-30 : f32
    %56 = vector.broadcast %cst_19 : f32 to vector<16x1xf32>
    %57 = arith.maximumf %55, %56 : vector<16x1xf32>
    %58 = tpu.reciprocal %57 {approx = true} : vector<16x1xf32> -> vector<16x1xf32>
    %59 = vector.broadcast %58 : vector<16x1xf32> to vector<16x16xf32>
    %60 = arith.mulf %53, %59 : vector<16x16xf32>
    %61 = vector.extract_strided_slice %4 {offsets = [0, 16], sizes = [16, 16], strides = [1, 1]} : vector<16x64xf32> to vector<16x16xf32>
    %62 = arith.truncf %60 : vector<16x16xf32> to vector<16x16xbf16>
    %63 = arith.truncf %61 : vector<16x16xf32> to vector<16x16xbf16>
    %cst_20 = arith.constant dense<0.000000e+00> : vector<16x16xf32>
    %64 = tpu.matmul %62, %63, %cst_20 {dimension_numbers = #tpu.dot_dimension_numbers<[1], [0], [0], [1], [0, 0, 1, 1], [], []>} : vector<16x16xbf16>, vector<16x16xbf16>, vector<16x16xf32> -> vector<16x16xf32>
    %65 = vector.extract_strided_slice %5 {offsets = [0, 2], sizes = [16, 1], strides = [1, 1]} : vector<16x4xf32> to vector<16x1xf32>
    %66 = vector.extract_strided_slice %7 {offsets = [2, 0], sizes = [1, 16], strides = [1, 1]} : vector<4x16xf32> to vector<1x16xf32>
    %67 = vector.broadcast %65 : vector<16x1xf32> to vector<16x16xf32>
    %68 = vector.broadcast %66 : vector<1x16xf32> to vector<16x16xf32>
    %69 = arith.addf %67, %68 : vector<16x16xf32>
    %cst_21 = arith.constant 2.000000e-01 : f32
    %70 = vector.broadcast %cst_21 : f32 to vector<16x16xf32>
    %71 = arith.mulf %70, %69 : vector<16x16xf32>
    %72 = arith.maximumf %69, %71 : vector<16x16xf32>
    %73 = arith.addf %72, %12 : vector<16x16xf32>
    %cst_22 = arith.constant dense<0xFF800000> : vector<16xf32>
    %74 = vector.multi_reduction <maximumf>, %73, %cst_22 [1] : vector<16x16xf32> to vector<16xf32>
    %75 = vector.shape_cast %74 : vector<16xf32> to vector<16x1xf32>
    %76 = vector.broadcast %75 : vector<16x1xf32> to vector<16x16xf32>
    %77 = arith.subf %73, %76 : vector<16x16xf32>
    %78 = math.exp %77 : vector<16x16xf32>
    %79 = arith.mulf %78, %1 : vector<16x16xf32>
    %cst_23 = arith.constant dense<0.000000e+00> : vector<16xf32>
    %80 = vector.multi_reduction <add>, %79, %cst_23 [1] : vector<16x16xf32> to vector<16xf32>
    %81 = vector.shape_cast %80 : vector<16xf32> to vector<16x1xf32>
    %cst_24 = arith.constant 1.000000e-30 : f32
    %82 = vector.broadcast %cst_24 : f32 to vector<16x1xf32>
    %83 = arith.maximumf %81, %82 : vector<16x1xf32>
    %84 = tpu.reciprocal %83 {approx = true} : vector<16x1xf32> -> vector<16x1xf32>
    %85 = vector.broadcast %84 : vector<16x1xf32> to vector<16x16xf32>
    %86 = arith.mulf %79, %85 : vector<16x16xf32>
    %87 = vector.extract_strided_slice %4 {offsets = [0, 32], sizes = [16, 16], strides = [1, 1]} : vector<16x64xf32> to vector<16x16xf32>
    %88 = arith.truncf %86 : vector<16x16xf32> to vector<16x16xbf16>
    %89 = arith.truncf %87 : vector<16x16xf32> to vector<16x16xbf16>
    %cst_25 = arith.constant dense<0.000000e+00> : vector<16x16xf32>
    %90 = tpu.matmul %88, %89, %cst_25 {dimension_numbers = #tpu.dot_dimension_numbers<[1], [0], [0], [1], [0, 0, 1, 1], [], []>} : vector<16x16xbf16>, vector<16x16xbf16>, vector<16x16xf32> -> vector<16x16xf32>
    %91 = vector.extract_strided_slice %5 {offsets = [0, 3], sizes = [16, 1], strides = [1, 1]} : vector<16x4xf32> to vector<16x1xf32>
    %92 = vector.extract_strided_slice %7 {offsets = [3, 0], sizes = [1, 16], strides = [1, 1]} : vector<4x16xf32> to vector<1x16xf32>
    %93 = vector.broadcast %91 : vector<16x1xf32> to vector<16x16xf32>
    %94 = vector.broadcast %92 : vector<1x16xf32> to vector<16x16xf32>
    %95 = arith.addf %93, %94 : vector<16x16xf32>
    %cst_26 = arith.constant 2.000000e-01 : f32
    %96 = vector.broadcast %cst_26 : f32 to vector<16x16xf32>
    %97 = arith.mulf %96, %95 : vector<16x16xf32>
    %98 = arith.maximumf %95, %97 : vector<16x16xf32>
    %99 = arith.addf %98, %12 : vector<16x16xf32>
    %cst_27 = arith.constant dense<0xFF800000> : vector<16xf32>
    %100 = vector.multi_reduction <maximumf>, %99, %cst_27 [1] : vector<16x16xf32> to vector<16xf32>
    %101 = vector.shape_cast %100 : vector<16xf32> to vector<16x1xf32>
    %102 = vector.broadcast %101 : vector<16x1xf32> to vector<16x16xf32>
    %103 = arith.subf %99, %102 : vector<16x16xf32>
    %104 = math.exp %103 : vector<16x16xf32>
    %105 = arith.mulf %104, %1 : vector<16x16xf32>
    %cst_28 = arith.constant dense<0.000000e+00> : vector<16xf32>
    %106 = vector.multi_reduction <add>, %105, %cst_28 [1] : vector<16x16xf32> to vector<16xf32>
    %107 = vector.shape_cast %106 : vector<16xf32> to vector<16x1xf32>
    %cst_29 = arith.constant 1.000000e-30 : f32
    %108 = vector.broadcast %cst_29 : f32 to vector<16x1xf32>
    %109 = arith.maximumf %107, %108 : vector<16x1xf32>
    %110 = tpu.reciprocal %109 {approx = true} : vector<16x1xf32> -> vector<16x1xf32>
    %111 = vector.broadcast %110 : vector<16x1xf32> to vector<16x16xf32>
    %112 = arith.mulf %105, %111 : vector<16x16xf32>
    %113 = vector.extract_strided_slice %4 {offsets = [0, 48], sizes = [16, 16], strides = [1, 1]} : vector<16x64xf32> to vector<16x16xf32>
    %114 = arith.truncf %112 : vector<16x16xf32> to vector<16x16xbf16>
    %115 = arith.truncf %113 : vector<16x16xf32> to vector<16x16xbf16>
    %cst_30 = arith.constant dense<0.000000e+00> : vector<16x16xf32>
    %116 = tpu.matmul %114, %115, %cst_30 {dimension_numbers = #tpu.dot_dimension_numbers<[1], [0], [0], [1], [0, 0, 1, 1], [], []>} : vector<16x16xbf16>, vector<16x16xbf16>, vector<16x16xf32> -> vector<16x16xf32>
    %117 = tpu.concatenate %38, %64, %90, %116 in 1 : vector<16x16xf32>, vector<16x16xf32>, vector<16x16xf32>, vector<16x16xf32> -> vector<16x64xf32>
    %c0_31 = arith.constant 0 : index
    %c0_32 = arith.constant 0 : index
    %118 = vector.load %arg5[%c0_31, %c0_32] : memref<1x64xf32, #tpu.memory_space<vmem>>, vector<1x64xf32>
    %119 = vector.broadcast %118 : vector<1x64xf32> to vector<16x64xf32>
    %120 = arith.addf %117, %119 : vector<16x64xf32>
    %c0_33 = arith.constant 0 : index
    %c0_34 = arith.constant 0 : index
    %121 = vector.load %arg6[%c0_33, %c0_34] : memref<16x64xf32, #tpu.memory_space<vmem>>, vector<16x64xf32>
    tpu.vector_store %arg6[%c0_33, %c0_34], %120 {strides = array<i32>} : memref<16x64xf32, #tpu.memory_space<vmem>>, vector<16x64xf32>,
    return
  }
  func.func @transform_0(%arg0: i32) -> (i32, i32) {
    %c0_i32 = arith.constant 0 : i32
    %c0_i32_0 = arith.constant 0 : i32
    %c0_i32_1 = arith.constant 0 : i32
    return %c0_i32, %c0_i32_0 : i32, i32
  }
  func.func @transform_1(%arg0: i32) -> (i32, i32) {
    %c0_i32 = arith.constant 0 : i32
    %c0_i32_0 = arith.constant 0 : i32
    %c0_i32_1 = arith.constant 0 : i32
    return %c0_i32, %c0_i32_0 : i32, i32
  }
  func.func @transform_2(%arg0: i32) -> (i32, i32) {
    %c0_i32 = arith.constant 0 : i32
    %c0_i32_0 = arith.constant 0 : i32
    %c0_i32_1 = arith.constant 0 : i32
    return %c0_i32, %c0_i32_0 : i32, i32
  }
  func.func @transform_3(%arg0: i32) -> (i32, i32) {
    %c0_i32 = arith.constant 0 : i32
    %c0_i32_0 = arith.constant 0 : i32
    %c0_i32_1 = arith.constant 0 : i32
    return %c0_i32, %c0_i32_0 : i32, i32
  }
  func.func @transform_4(%arg0: i32) -> (i32, i32) {
    %c0_i32 = arith.constant 0 : i32
    %c0_i32_0 = arith.constant 0 : i32
    %c0_i32_1 = arith.constant 0 : i32
    return %c0_i32, %c0_i32_0 : i32, i32
  }
  func.func @transform_5(%arg0: i32) -> (i32, i32) {
    %c0_i32 = arith.constant 0 : i32
    %c0_i32_0 = arith.constant 0 : i32
    %c0_i32_1 = arith.constant 0 : i32
    return %c0_i32, %c0_i32_0 : i32, i32
  }
}

</mosaic_0001>

<llo_original>
// kernel: tpu_custom_call.1
$region0: #{tpu_custom_call.1}
  #allocation0 [shape = 'u32[]', space=smem, size = 0x4, offset = 0x4, fixed_abs, tag = 'smem constant byte address 0x4 - core index']
  #allocation1 [shape = 'u32[144,128]{1,0:T(1,128)}', space=vmem, size = 0x12000, scoped, tag = 'internal scratch']
  %s0 = inlined_call_operand.hbm [shape: bf16[16,16], index: 0, kind: input, shape index: {}]
  %s1 = inlined_call_operand.hbm [shape: bf16[16,68], index: 1, kind: input, shape index: {}]
  %s2 = inlined_call_operand.vmem [shape: bf16[4,16], index: 2, kind: input, shape index: {}]
  %s3 = inlined_call_operand.hbm [shape: f32[16,16], index: 3, kind: input, shape index: {}]
  %s4 = inlined_call_operand.vmem [shape: f32[1,64], index: 4, kind: input, shape index: {}]
  %s5 = inlined_call_operand.hbm [shape: f32[16,64], index: 5, kind: output, shape index: {}]
  %s6 = sld [smem:[#allocation0]]
  $region42: #{tpu_custom_call.1} parent=0
    _
  %s8 = ssub.s32 1, %s6
  %s9 = scalar_select 0, %s8, %s6
  $region1: #{tpu_custom_call.1} parent=0
    #allocation2 [shape = 'u8[4096]{0}', space=vmem, size = 0x1000, scoped, tag = 'input window, operand 0, single buffered']
    #allocation3 [shape = 's32[1]{0}', space=sflag, size = 0x4, scoped, tag = 'scoped memory for tpu_custom_call.1']
    #allocation4 [shape = 's32[1]{0}', space=sflag, size = 0x4, scoped, tag = 'scoped memory for tpu_custom_call.1']
    #allocation5 [shape = 'u8[4096]{0}', space=vmem, size = 0x1000, scoped, tag = 'input window, operand 1, single buffered']
    #allocation6 [shape = 's32[1]{0}', space=sflag, size = 0x4, scoped, tag = 'scoped memory for tpu_custom_call.1']
    #allocation7 [shape = 'u8[8192]{0}', space=vmem, size = 0x2000, scoped, tag = 'input window, operand 3, single buffered']
    #allocation8 [shape = 'u8[8192]{0}', space=vmem, size = 0x2000, scoped, tag = 'output window, operand 0, single buffered']
    %10 = vsyncpa [#allocation3], 0
    %11 = vsyncpa [#allocation6], 0
    %12 = vsyncpa [#allocation4], 0
    // Predicated region
    $region2: #{tpu_custom_call.1} parent=1 // pred_check
      _
    $region3: #{tpu_custom_call.1} parent=1 // pred_check_branch
      %14 = sbr.rel (0) target = $region5
    $region4: #{tpu_custom_call.1} parent=1 // pred_region
      %s16 = ssub.s32 128, 128
      %17 = vsyncadd [#allocation3], %s16
      %s18 = sshll.u32 [#allocation2], 4
      %s19 = int_to_ptr.vmem [resolvable:$true] %s18
      %24 = dma.hbm_to_vmem [thread:$0]  %s0, 128, %s19, [#allocation3], 64, 64, 4
    $region5: #{tpu_custom_call.1} parent=1 // pred_fallthru
      _
    // Predicated region
    $region6: #{tpu_custom_call.1} parent=1 // pred_check
      _
    $region7: #{tpu_custom_call.1} parent=1 // pred_check_branch
      %26 = sbr.rel (0) target = $region9
    $region8: #{tpu_custom_call.1} parent=1 // pred_region
      %s28 = ssub.s32 128, 128
      %29 = vsyncadd [#allocation6], %s28
      %s30 = sshll.u32 [#allocation5], 4
      %s31 = int_to_ptr.vmem [resolvable:$true] %s30
      %36 = dma.hbm_to_vmem [thread:$0]  %s1, 128, %s31, [#allocation6], 64, 64, 4
    $region9: #{tpu_custom_call.1} parent=1 // pred_fallthru
      _
    // Predicated region
    $region10: #{tpu_custom_call.1} parent=1 // pred_check
      _
    $region11: #{tpu_custom_call.1} parent=1 // pred_check_branch
      %38 = sbr.rel (0) target = $region13
    $region12: #{tpu_custom_call.1} parent=1 // pred_region
      _
    $region13: #{tpu_custom_call.1} parent=1 // pred_fallthru
      _
    // Predicated region
    $region14: #{tpu_custom_call.1} parent=1 // pred_check
      _
    $region15: #{tpu_custom_call.1} parent=1 // pred_check_branch
      %40 = sbr.rel (0) target = $region17
    $region16: #{tpu_custom_call.1} parent=1 // pred_region
      %s42 = ssub.s32 256, 256
      %43 = vsyncadd [#allocation6], %s42
      %s44 = sshll.u32 [#allocation7], 4
      %s45 = int_to_ptr.vmem [resolvable:$true] %s44
      %50 = dma.hbm_to_vmem [thread:$0]  %s3, 256, %s45, [#allocation6], 128, 128, 8
    $region17: #{tpu_custom_call.1} parent=1 // pred_fallthru
      _
    // Predicated region
    $region18: #{tpu_custom_call.1} parent=1 // pred_check
      _
    $region19: #{tpu_custom_call.1} parent=1 // pred_check_branch
      %52 = sbr.rel (0) target = $region21
    $region20: #{tpu_custom_call.1} parent=1 // pred_region
      _
    $region21: #{tpu_custom_call.1} parent=1 // pred_fallthru
      _
    // Predicated region
    $region22: #{tpu_custom_call.1} parent=1 // pred_check
      _
    $region23: #{tpu_custom_call.1} parent=1 // pred_check_branch
      %54 = sbr.rel (0) target = $region25
    $region24: #{tpu_custom_call.1} parent=1 // pred_region
      %55 = dma.done [#allocation3], 128
    $region25: #{tpu_custom_call.1} parent=1 // pred_fallthru
      _
    // Predicated region
    $region26: #{tpu_custom_call.1} parent=1 // pred_check
      _
    $region27: #{tpu_custom_call.1} parent=1 // pred_check_branch
      %57 = sbr.rel (0) target = $region29
    $region28: #{tpu_custom_call.1} parent=1 // pred_region
      %58 = dma.done [#allocation6], 128
    $region29: #{tpu_custom_call.1} parent=1 // pred_fallthru
      _
    // Predicated region
    $region30: #{tpu_custom_call.1} parent=1 // pred_check
      _
    $region31: #{tpu_custom_call.1} parent=1 // pred_check_branch
      %60 = sbr.rel (0) target = $region33
    $region32: #{tpu_custom_call.1} parent=1 // pred_region
      %61 = dma.done [#allocation6], 256
    $region33: #{tpu_custom_call.1} parent=1 // pred_fallthru
      _
    %v63 = vld [vmem:[#allocation2] sm:$0xf]
    %v64 = vld [vmem:[#allocation2 + $0x4] sm:$0xf]
    %v65 = vld [vmem:[#allocation7] sm:$0xff]
    %v66 = vld [vmem:[#allocation7 + $0x8] sm:$0xff]
    %v67 = vld [vmem:[#allocation5] sm:$0xf]
    %v68 = vld [vmem:[#allocation5 + $0x4] sm:$0xf]
    %v71 = vunpack.c.l.b16 %v63
    %v72 = vunpack.c.l.b16 %v64
    %v73 = vpack.c.b16 %v72, %v71
    %v76 = vunpack.c.l.b16 %v67
    %v77 = vunpack.c.l.b16 %v68
    %v78 = vpack.c.b16 %v77, %v76
    %vm80 = vcmask 130048
    %v82 = vsel %vm80, %v73, 0
    %84 = vmatprep.subr.bf16.mxu0 0
    %85 = vmatpush1.bf16.msra.mxu0 0
    %86 = vmatprep.subr.bf16.mxu0 0
    %87 = vmatpush1.bf16.msra.mxu0 0
    %88 = vmatprep.subr.bf16.mxu0 0
    %89 = vmatpush1.bf16.msra.mxu0 0
    %90 = vmatprep.subr.bf16.mxu0 0
    %91 = vmatpush1.bf16.msra.mxu0 0
    %92 = vmatprep.subr.bf16.mxu0 0
    %93 = vmatpush1.bf16.msra.mxu0 0
    %94 = vmatprep.subr.bf16.mxu0 0
    %95 = vmatpush1.bf16.msra.mxu0 0
    %96 = vmatprep.subr.bf16.mxu0 0
    %97 = vmatpush1.bf16.msra.mxu0 0
    %98 = vmatprep.subr.bf16.mxu0 0
    %99 = vmatpush1.bf16.msra.mxu0 %v78
    %100 = vmatprep.subr.bf16.mxu0 0
    %101 = vmatpush2.bf16.msra.mxu0 0
    %102 = vmatprep.subr.bf16.mxu0 0
    %103 = vmatpush2.bf16.msra.mxu0 0
    %104 = vmatprep.subr.bf16.mxu0 0
    %105 = vmatpush2.bf16.msra.mxu0 0
    %106 = vmatprep.subr.bf16.mxu0 0
    %107 = vmatpush2.bf16.msra.mxu0 0
    %108 = vmatprep.subr.bf16.mxu0 0
    %109 = vmatpush2.bf16.msra.mxu0 0
    %110 = vmatprep.subr.bf16.mxu0 0
    %111 = vmatpush2.bf16.msra.mxu0 0
    %112 = vmatprep.subr.bf16.mxu0 0
    %113 = vmatpush2.bf16.msra.mxu0 0
    %114 = vmatprep.subr.bf16.mxu0 0
    %115 = vmatpush2.bf16.msra.mxu0 0
    %116 = vmatprep.mubr.bf16.mxu0 0
    %117 = vmatmul.mubr.bf16.gmra.mxu0 %v82
    %v118 = vpop.f32.mrf.mxu0
    %v119 = vadd.f32 0.0, %v118
    %v120 = vpop.f32.mrf.mxu0
    %v121 = vpop.f32.mrf.mxu0
    %v122 = vadd.f32 0.0, %v121
    %v123 = vpop.f32.mrf.mxu0
    %124 = vdwg.mxu0
    %v125 = vld [vmem:[%s2] sm:$0x3]
    %v127 = vsel %vm80, %v125, 0
    %129 = vmatprep.subr.bf16.mxu0 0
    %130 = vmatpush1.bf16.xpose.msra.mxu0 0
    %131 = vmatprep.subr.bf16.mxu0 0
    %132 = vmatpush1.bf16.xpose.msra.mxu0 0
    %133 = vmatprep.subr.bf16.mxu0 0
    %134 = vmatpush1.bf16.xpose.msra.mxu0 0
    %135 = vmatprep.subr.bf16.mxu0 0
    %136 = vmatpush1.bf16.xpose.msra.mxu0 0
    %137 = vmatprep.subr.bf16.mxu0 0
    %138 = vmatpush1.bf16.xpose.msra.mxu0 0
    %139 = vmatprep.subr.bf16.mxu0 0
    %140 = vmatpush1.bf16.xpose.msra.mxu0 0
    %141 = vmatprep.subr.bf16.mxu0 0
    %142 = vmatpush1.bf16.xpose.msra.mxu0 0
    %143 = vmatprep.subr.bf16.mxu0 0
    %144 = vmatpush1.bf16.xpose.msra.mxu0 %v82
    %145 = vmatprep.subr.bf16.mxu0 0
    %146 = vmatpush2.bf16.xpose.msra.mxu0 0
    %147 = vmatprep.subr.bf16.mxu0 0
    %148 = vmatpush2.bf16.xpose.msra.mxu0 0
    %149 = vmatprep.subr.bf16.mxu0 0
    %150 = vmatpush2.bf16.xpose.msra.mxu0 0
    %151 = vmatprep.subr.bf16.mxu0 0
    %152 = vmatpush2.bf16.xpose.msra.mxu0 0
    %153 = vmatprep.subr.bf16.mxu0 0
    %154 = vmatpush2.bf16.xpose.msra.mxu0 0
    %155 = vmatprep.subr.bf16.mxu0 0
    %156 = vmatpush2.bf16.xpose.msra.mxu0 0
    %157 = vmatprep.subr.bf16.mxu0 0
    %158 = vmatpush2.bf16.xpose.msra.mxu0 0
    %159 = vmatprep.subr.bf16.mxu0 0
    %160 = vmatpush2.bf16.xpose.msra.mxu0 0
    %161 = vmatprep.mubr.bf16.mxu0 0
    %162 = vmatmul.mubr.bf16.gmra.mxu0 %v127
    %v163 = vpop.f32.mrf.mxu0
    %v164 = vadd.f32 0.0, %v163
    %v165 = vpop.f32.mrf.mxu0
    %v166 = vpop.f32.mrf.mxu0
    %v167 = vpop.f32.mrf.mxu0
    %168 = vdwg.mxu0
    %vm169 = vcmp.gt.f32.partialorder %v65, 0.0
    %vm170 = vcmp.gt.f32.partialorder %v66, 0.0
    %v171 = vsel %vm169, 0.0, -1e+30
    %v172 = vsel %vm170, 0.0, -1e+30
    %174 = vset.pattern.permute.xlu0 64
    %175 = vperm.xlu0 %174, %v119
    %v176 = vpop.permute.xlu0 %175
    %179 = vset.pattern.permute.xlu0 64
    %180 = vperm.xlu0 %179, %v122
    %v181 = vpop.permute.xlu0 %180
    %v183 = vlaneseq
    %v184 = vshrl.u32 %v183, 7
    %v185 = vsub.s32 0, %v184
    %v186 = vrot.slane %v164, %v185
    %v187 = vadd.f32 %v176, %v186
    %v188 = vadd.f32 %v181, %v186
    %v189 = vmul.f32 %v187, 0.2
    %v190 = vmul.f32 %v188, 0.2
    %v191 = vmax.f32 %v187, %v189
    %v192 = vmax.f32 %v188, %v190
    %v193 = vadd.f32 %v191, %v171
    %v194 = vadd.f32 %v192, %v172
    %v195 = vsel %vm80, %v193, -inf
    %196 = vmax.xlane.f32.xlu0 %v195
    %v197 = vpop.xlane.xlu0 %196
    %v198 = vsel %vm80, %v194, -inf
    %199 = vmax.xlane.f32.xlu0 %v198
    %v200 = vpop.xlane.xlu0 %199
    %v201 = vsub.f32 %v193, %v197
    %v202 = vsub.f32 %v194, %v200
    %v203 = vmul.f32 %v201, 1.442695
    %v204 = vpow.pop %v203
    %v205 = vmul.f32 %v202, 1.442695
    %v206 = vpow.pop %v205
    %v207 = vmul.f32 %v204, %v65
    %v208 = vmul.f32 %v206, %v66
    %v209 = vsel %vm80, %v207, 0.0
    %210 = vadd.xlane.f32.xlu0 %v209
    %v211 = vpop.xlane.xlu0 %210
    %v212 = vsel %vm80, %v208, 0.0
    %213 = vadd.xlane.f32.xlu0 %v212
    %v214 = vpop.xlane.xlu0 %213
    %v215 = vmax.f32 %v211, 1e-30
    %v216 = vmax.f32 %v214, 1e-30
    %v217 = vrcp.pop %v215
    %v218 = vrcp.pop %v216
    %v219 = vmul.f32 %v207, %v217
    %v220 = vmul.f32 %v208, %v218
    %v221 = vpack.c.bf16 %v220, %v219
    %v222 = vpack.c.bf16 %v122, %v119
    %v224 = vsel %vm80, %v221, 0
    %226 = vmatprep.subr.bf16.mxu0 0
    %227 = vmatpush1.bf16.msra.mxu0 0
    %228 = vmatprep.subr.bf16.mxu0 0
    %229 = vmatpush1.bf16.msra.mxu0 0
    %230 = vmatprep.subr.bf16.mxu0 0
    %231 = vmatpush1.bf16.msra.mxu0 0
    %232 = vmatprep.subr.bf16.mxu0 0
    %233 = vmatpush1.bf16.msra.mxu0 0
    %234 = vmatprep.subr.bf16.mxu0 0
    %235 = vmatpush1.bf16.msra.mxu0 0
    %236 = vmatprep.subr.bf16.mxu0 0
    %237 = vmatpush1.bf16.msra.mxu0 0
    %238 = vmatprep.subr.bf16.mxu0 0
    %239 = vmatpush1.bf16.msra.mxu0 0
    %240 = vmatprep.subr.bf16.mxu0 0
    %241 = vmatpush1.bf16.msra.mxu0 %v222
    %242 = vmatprep.subr.bf16.mxu0 0
    %243 = vmatpush2.bf16.msra.mxu0 0
    %244 = vmatprep.subr.bf16.mxu0 0
    %245 = vmatpush2.bf16.msra.mxu0 0
    %246 = vmatprep.subr.bf16.mxu0 0
    %247 = vmatpush2.bf16.msra.mxu0 0
    %248 = vmatprep.subr.bf16.mxu0 0
    %249 = vmatpush2.bf16.msra.mxu0 0
    %250 = vmatprep.subr.bf16.mxu0 0
    %251 = vmatpush2.bf16.msra.mxu0 0
    %252 = vmatprep.subr.bf16.mxu0 0
    %253 = vmatpush2.bf16.msra.mxu0 0
    %254 = vmatprep.subr.bf16.mxu0 0
    %255 = vmatpush2.bf16.msra.mxu0 0
    %256 = vmatprep.subr.bf16.mxu0 0
    %257 = vmatpush2.bf16.msra.mxu0 0
    %258 = vmatprep.mubr.bf16.mxu0 0
    %259 = vmatmul.mubr.bf16.gmra.mxu0 %v224
    %v260 = vpop.f32.mrf.mxu0
    %v261 = vadd.f32 0.0, %v260
    %v262 = vpop.f32.mrf.mxu0
    %v263 = vpop.f32.mrf.mxu0
    %v264 = vadd.f32 0.0, %v263
    %v265 = vpop.f32.mrf.mxu0
    %266 = vdwg.mxu0
    %267 = vset.pattern.permute.xlu0 65
    %268 = vperm.xlu0 %267, %v119
    %v269 = vpop.permute.xlu0 %268
    %271 = vset.pattern.permute.xlu0 65
    %272 = vperm.xlu0 %271, %v122
    %v273 = vpop.permute.xlu0 %272
    %v275 = vlaneseq
    %v276 = vshrl.u32 %v275, 7
    %v277 = vsub.s32 1, %v276
    %v278 = vrot.slane %v164, %v277
    %v279 = vadd.f32 %v269, %v278
    %v280 = vadd.f32 %v273, %v278
    %v281 = vmul.f32 %v279, 0.2
    %v282 = vmul.f32 %v280, 0.2
    %v283 = vmax.f32 %v279, %v281
    %v284 = vmax.f32 %v280, %v282
    %v285 = vadd.f32 %v283, %v171
    %v286 = vadd.f32 %v284, %v172
    %v287 = vsel %vm80, %v285, -inf
    %288 = vmax.xlane.f32.xlu0 %v287
    %v289 = vpop.xlane.xlu0 %288
    %v290 = vsel %vm80, %v286, -inf
    %291 = vmax.xlane.f32.xlu0 %v290
    %v292 = vpop.xlane.xlu0 %291
    %v293 = vsub.f32 %v285, %v289
    %v294 = vsub.f32 %v286, %v292
    %v295 = vmul.f32 %v293, 1.442695
    %v296 = vpow.pop %v295
    %v297 = vmul.f32 %v294, 1.442695
    %v298 = vpow.pop %v297
    %v299 = vmul.f32 %v296, %v65
    %v300 = vmul.f32 %v298, %v66
    %v301 = vsel %vm80, %v299, 0.0
    %302 = vadd.xlane.f32.xlu0 %v301
    %v303 = vpop.xlane.xlu0 %302
    %v304 = vsel %vm80, %v300, 0.0
    %305 = vadd.xlane.f32.xlu0 %v304
    %v306 = vpop.xlane.xlu0 %305
    %v307 = vmax.f32 %v303, 1e-30
    %v308 = vmax.f32 %v306, 1e-30
    %v309 = vrcp.pop %v307
    %v310 = vrcp.pop %v308
    %v311 = vmul.f32 %v299, %v309
    %v312 = vmul.f32 %v300, %v310
    %v313 = vpack.c.bf16 %v312, %v311
    %315 = vrot.lane.b32.xlu0 %v222, 112
    %v316 = vpop.permute.xlu0 %315
    %v319 = vsel %vm80, %v313, 0
    %321 = vmatprep.subr.bf16.mxu0 0
    %322 = vmatpush1.bf16.msra.mxu0 0
    %323 = vmatprep.subr.bf16.mxu0 0
    %324 = vmatpush1.bf16.msra.mxu0 0
    %325 = vmatprep.subr.bf16.mxu0 0
    %326 = vmatpush1.bf16.msra.mxu0 0
    %327 = vmatprep.subr.bf16.mxu0 0
    %328 = vmatpush1.bf16.msra.mxu0 0
    %329 = vmatprep.subr.bf16.mxu0 0
    %330 = vmatpush1.bf16.msra.mxu0 0
    %331 = vmatprep.subr.bf16.mxu0 0
    %332 = vmatpush1.bf16.msra.mxu0 0
    %333 = vmatprep.subr.bf16.mxu0 0
    %334 = vmatpush1.bf16.msra.mxu0 0
    %335 = vmatprep.subr.bf16.mxu0 0
    %336 = vmatpush1.bf16.msra.mxu0 %v316
    %337 = vmatprep.subr.bf16.mxu0 0
    %338 = vmatpush2.bf16.msra.mxu0 0
    %339 = vmatprep.subr.bf16.mxu0 0
    %340 = vmatpush2.bf16.msra.mxu0 0
    %341 = vmatprep.subr.bf16.mxu0 0
    %342 = vmatpush2.bf16.msra.mxu0 0
    %343 = vmatprep.subr.bf16.mxu0 0
    %344 = vmatpush2.bf16.msra.mxu0 0
    %345 = vmatprep.subr.bf16.mxu0 0
    %346 = vmatpush2.bf16.msra.mxu0 0
    %347 = vmatprep.subr.bf16.mxu0 0
    %348 = vmatpush2.bf16.msra.mxu0 0
    %349 = vmatprep.subr.bf16.mxu0 0
    %350 = vmatpush2.bf16.msra.mxu0 0
    %351 = vmatprep.subr.bf16.mxu0 0
    %352 = vmatpush2.bf16.msra.mxu0 0
    %353 = vmatprep.mubr.bf16.mxu0 0
    %354 = vmatmul.mubr.bf16.gmra.mxu0 %v319
    %v355 = vpop.f32.mrf.mxu0
    %v356 = vadd.f32 0.0, %v355
    %v357 = vpop.f32.mrf.mxu0
    %v358 = vpop.f32.mrf.mxu0
    %v359 = vadd.f32 0.0, %v358
    %v360 = vpop.f32.mrf.mxu0
    %361 = vdwg.mxu0
    %362 = vset.pattern.permute.xlu0 66
    %363 = vperm.xlu0 %362, %v119
    %v364 = vpop.permute.xlu0 %363
    %366 = vset.pattern.permute.xlu0 66
    %367 = vperm.xlu0 %366, %v122
    %v368 = vpop.permute.xlu0 %367
    %v370 = vlaneseq
    %v371 = vshrl.u32 %v370, 7
    %v372 = vsub.s32 2, %v371
    %v373 = vrot.slane %v164, %v372
    %v374 = vadd.f32 %v364, %v373
    %v375 = vadd.f32 %v368, %v373
    %v376 = vmul.f32 %v374, 0.2
    %v377 = vmul.f32 %v375, 0.2
    %v378 = vmax.f32 %v374, %v376
    %v379 = vmax.f32 %v375, %v377
    %v380 = vadd.f32 %v378, %v171
    %v381 = vadd.f32 %v379, %v172
    %v382 = vsel %vm80, %v380, -inf
    %383 = vmax.xlane.f32.xlu0 %v382
    %v384 = vpop.xlane.xlu0 %383
    %v385 = vsel %vm80, %v381, -inf
    %386 = vmax.xlane.f32.xlu0 %v385
    %v387 = vpop.xlane.xlu0 %386
    %v388 = vsub.f32 %v380, %v384
    %v389 = vsub.f32 %v381, %v387
    %v390 = vmul.f32 %v388, 1.442695
    %v391 = vpow.pop %v390
    %v392 = vmul.f32 %v389, 1.442695
    %v393 = vpow.pop %v392
    %v394 = vmul.f32 %v391, %v65
    %v395 = vmul.f32 %v393, %v66
    %v396 = vsel %vm80, %v394, 0.0
    %397 = vadd.xlane.f32.xlu0 %v396
    %v398 = vpop.xlane.xlu0 %397
    %v399 = vsel %vm80, %v395, 0.0
    %400 = vadd.xlane.f32.xlu0 %v399
    %v401 = vpop.xlane.xlu0 %400
    %v402 = vmax.f32 %v398, 1e-30
    %v403 = vmax.f32 %v401, 1e-30
    %v404 = vrcp.pop %v402
    %v405 = vrcp.pop %v403
    %v406 = vmul.f32 %v394, %v404
    %v407 = vmul.f32 %v395, %v405
    %v408 = vpack.c.bf16 %v407, %v406
    %409 = vrot.lane.b32.xlu0 %v222, 96
    %v410 = vpop.permute.xlu0 %409
    %v413 = vsel %vm80, %v408, 0
    %415 = vmatprep.subr.bf16.mxu0 0
    %416 = vmatpush1.bf16.msra.mxu0 0
    %417 = vmatprep.subr.bf16.mxu0 0
    %418 = vmatpush1.bf16.msra.mxu0 0
    %419 = vmatprep.subr.bf16.mxu0 0
    %420 = vmatpush1.bf16.msra.mxu0 0
    %421 = vmatprep.subr.bf16.mxu0 0
    %422 = vmatpush1.bf16.msra.mxu0 0
    %423 = vmatprep.subr.bf16.mxu0 0
    %424 = vmatpush1.bf16.msra.mxu0 0
    %425 = vmatprep.subr.bf16.mxu0 0
    %426 = vmatpush1.bf16.msra.mxu0 0
    %427 = vmatprep.subr.bf16.mxu0 0
    %428 = vmatpush1.bf16.msra.mxu0 0
    %429 = vmatprep.subr.bf16.mxu0 0
    %430 = vmatpush1.bf16.msra.mxu0 %v410
    %431 = vmatprep.subr.bf16.mxu0 0
    %432 = vmatpush2.bf16.msra.mxu0 0
    %433 = vmatprep.subr.bf16.mxu0 0
    %434 = vmatpush2.bf16.msra.mxu0 0
    %435 = vmatprep.subr.bf16.mxu0 0
    %436 = vmatpush2.bf16.msra.mxu0 0
    %437 = vmatprep.subr.bf16.mxu0 0
    %438 = vmatpush2.bf16.msra.mxu0 0
    %439 = vmatprep.subr.bf16.mxu0 0
    %440 = vmatpush2.bf16.msra.mxu0 0
    %441 = vmatprep.subr.bf16.mxu0 0
    %442 = vmatpush2.bf16.msra.mxu0 0
    %443 = vmatprep.subr.bf16.mxu0 0
    %444 = vmatpush2.bf16.msra.mxu0 0
    %445 = vmatprep.subr.bf16.mxu0 0
    %446 = vmatpush2.bf16.msra.mxu0 0
    %447 = vmatprep.mubr.bf16.mxu0 0
    %448 = vmatmul.mubr.bf16.gmra.mxu0 %v413
    %v449 = vpop.f32.mrf.mxu0
    %v450 = vadd.f32 0.0, %v449
    %v451 = vpop.f32.mrf.mxu0
    %v452 = vpop.f32.mrf.mxu0
    %v453 = vadd.f32 0.0, %v452
    %v454 = vpop.f32.mrf.mxu0
    %455 = vdwg.mxu0
    %456 = vset.pattern.permute.xlu0 67
    %457 = vperm.xlu0 %456, %v119
    %v458 = vpop.permute.xlu0 %457
    %460 = vset.pattern.permute.xlu0 67
    %461 = vperm.xlu0 %460, %v122
    %v462 = vpop.permute.xlu0 %461
    %v464 = vlaneseq
    %v465 = vshrl.u32 %v464, 7
    %v466 = vsub.s32 3, %v465
    %v467 = vrot.slane %v164, %v466
    %v468 = vadd.f32 %v458, %v467
    %v469 = vadd.f32 %v462, %v467
    %v470 = vmul.f32 %v468, 0.2
    %v471 = vmul.f32 %v469, 0.2
    %v472 = vmax.f32 %v468, %v470
    %v473 = vmax.f32 %v469, %v471
    %v474 = vadd.f32 %v472, %v171
    %v475 = vadd.f32 %v473, %v172
    %v476 = vsel %vm80, %v474, -inf
    %477 = vmax.xlane.f32.xlu0 %v476
    %v478 = vpop.xlane.xlu0 %477
    %v479 = vsel %vm80, %v475, -inf
    %480 = vmax.xlane.f32.xlu0 %v479
    %v481 = vpop.xlane.xlu0 %480
    %v482 = vsub.f32 %v474, %v478
    %v483 = vsub.f32 %v475, %v481
    %v484 = vmul.f32 %v482, 1.442695
    %v485 = vpow.pop %v484
    %v486 = vmul.f32 %v483, 1.442695
    %v487 = vpow.pop %v486
    %v488 = vmul.f32 %v485, %v65
    %v489 = vmul.f32 %v487, %v66
    %v490 = vsel %vm80, %v488, 0.0
    %491 = vadd.xlane.f32.xlu0 %v490
    %v492 = vpop.xlane.xlu0 %491
    %v493 = vsel %vm80, %v489, 0.0
    %494 = vadd.xlane.f32.xlu0 %v493
    %v495 = vpop.xlane.xlu0 %494
    %v496 = vmax.f32 %v492, 1e-30
    %v497 = vmax.f32 %v495, 1e-30
    %v498 = vrcp.pop %v496
    %v499 = vrcp.pop %v497
    %v500 = vmul.f32 %v488, %v498
    %v501 = vmul.f32 %v489, %v499
    %v502 = vpack.c.bf16 %v501, %v500
    %503 = vrot.lane.b32.xlu0 %v222, 80
    %v504 = vpop.permute.xlu0 %503
    %v507 = vsel %vm80, %v502, 0
    %509 = vmatprep.subr.bf16.mxu0 0
    %510 = vmatpush1.bf16.msra.mxu0 0
    %511 = vmatprep.subr.bf16.mxu0 0
    %512 = vmatpush1.bf16.msra.mxu0 0
    %513 = vmatprep.subr.bf16.mxu0 0
    %514 = vmatpush1.bf16.msra.mxu0 0
    %515 = vmatprep.subr.bf16.mxu0 0
    %516 = vmatpush1.bf16.msra.mxu0 0
    %517 = vmatprep.subr.bf16.mxu0 0
    %518 = vmatpush1.bf16.msra.mxu0 0
    %519 = vmatprep.subr.bf16.mxu0 0
    %520 = vmatpush1.bf16.msra.mxu0 0
    %521 = vmatprep.subr.bf16.mxu0 0
    %522 = vmatpush1.bf16.msra.mxu0 0
    %523 = vmatprep.subr.bf16.mxu0 0
    %524 = vmatpush1.bf16.msra.mxu0 %v504
    %525 = vmatprep.subr.bf16.mxu0 0
    %526 = vmatpush2.bf16.msra.mxu0 0
    %527 = vmatprep.subr.bf16.mxu0 0
    %528 = vmatpush2.bf16.msra.mxu0 0
    %529 = vmatprep.subr.bf16.mxu0 0
    %530 = vmatpush2.bf16.msra.mxu0 0
    %531 = vmatprep.subr.bf16.mxu0 0
    %532 = vmatpush2.bf16.msra.mxu0 0
    %533 = vmatprep.subr.bf16.mxu0 0
    %534 = vmatpush2.bf16.msra.mxu0 0
    %535 = vmatprep.subr.bf16.mxu0 0
    %536 = vmatpush2.bf16.msra.mxu0 0
    %537 = vmatprep.subr.bf16.mxu0 0
    %538 = vmatpush2.bf16.msra.mxu0 0
    %539 = vmatprep.subr.bf16.mxu0 0
    %540 = vmatpush2.bf16.msra.mxu0 0
    %541 = vmatprep.mubr.bf16.mxu0 0
    %542 = vmatmul.mubr.bf16.gmra.mxu0 %v507
    %v543 = vpop.f32.mrf.mxu0
    %v544 = vadd.f32 0.0, %v543
    %v545 = vpop.f32.mrf.mxu0
    %v546 = vpop.f32.mrf.mxu0
    %v547 = vadd.f32 0.0, %v546
    %v548 = vpop.f32.mrf.mxu0
    %549 = vdwg.mxu0
    %552 = vrot.lane.b32.xlu0 %v356, 16
    %v553 = vpop.permute.xlu0 %552
    %554 = vrot.lane.b32.xlu0 %v359, 16
    %v555 = vpop.permute.xlu0 %554
    %560 = vrot.lane.b32.xlu0 %v450, 32
    %v561 = vpop.permute.xlu0 %560
    %562 = vrot.lane.b32.xlu0 %v453, 32
    %v563 = vpop.permute.xlu0 %562
    %568 = vrot.lane.b32.xlu0 %v544, 48
    %v569 = vpop.permute.xlu0 %568
    %570 = vrot.lane.b32.xlu0 %v547, 48
    %v571 = vpop.permute.xlu0 %570
    %v574 = vsel %vm80, %v261, %v553
    %v575 = vsel %vm80, %v264, %v555
    %vm576 = vcmask 261120
    %v577 = vsel %vm576, %v574, %v561
    %v578 = vsel %vm576, %v575, %v563
    %vm579 = vcmask 392192
    %v580 = vsel %vm579, %v577, %v569
    %v581 = vsel %vm579, %v578, %v571
    %v582 = vld [vmem:[%s4] sm:$0x1]
    %v584 = vlaneseq
    %v585 = vshrl.u32 %v584, 7
    %v586 = vsub.s32 0, %v585
    %v587 = vrot.slane %v582, %v586
    %v589 = vadd.f32 %v580, %v587
    %v590 = vadd.f32 %v581, %v587
    %vm591 = vcmask 523264
    %592 = vst.msk [vmem:[#allocation8] sm:$0xff] %vm591, %v589
    %593 = vst.msk [vmem:[#allocation8 + $0x8] sm:$0xff] %vm591, %v590
    // Predicated region
    $region34: #{tpu_custom_call.1} parent=1 // pred_check
      _
    $region35: #{tpu_custom_call.1} parent=1 // pred_check_branch
      %595 = sbr.rel (0) target = $region37
    $region36: #{tpu_custom_call.1} parent=1 // pred_region
      %s597 = ssub.s32 256, 256
      %598 = vsyncadd [#allocation4], %s597
      %s599 = sshll.u32 [#allocation8], 4
      %s600 = int_to_ptr.vmem [resolvable:$true] %s599
      %605 = dma.vmem_to_hbm [thread:$0]  %s600, 256, %s5, [#allocation4], 128, 128, 8
    $region37: #{tpu_custom_call.1} parent=1 // pred_fallthru
      _
    // Predicated region
    $region38: #{tpu_custom_call.1} parent=1 // pred_check
      _
    $region39: #{tpu_custom_call.1} parent=1 // pred_check_branch
      %607 = sbr.rel (0) target = $region41
    $region40: #{tpu_custom_call.1} parent=1 // pred_region
      %608 = dma.done [#allocation4], 256
    $region41: #{tpu_custom_call.1} parent=1 // pred_fallthru
      _
    %609 = vsyncpa [#allocation3], 1
    %610 = vsyncpa [#allocation6], 1
    %611 = vsyncpa [#allocation4], 1

</llo_original>
